<compile_context>
chip_gen: v5e
topology: v5e:2x2
jax: 0.10.0
libtpu: 0.0.40
codegen_flags: <defaults>
</compile_context>

<pallas_src>
import math
import functools

import jax
import jax.numpy as jnp
import numpy as np
from jax.experimental import pallas as pl
from jax.experimental.pallas import tpu as pltpu


# ----------------------------- in-kernel helpers -----------------------------

_SQRT_HALF = 0.7071067811865476


def _recip_f32(x, refine):
    # EUP approximate reciprocal (free slot).  One Newton-Raphson refinement on
    # the f32-exact path; the bf16 fast path keeps the raw approximation
    # (perf-review item: fewer VALU ops where the VPU binds on v6e/v7x).
    r = pl.reciprocal(x, approx=True)
    if refine:
        r = r * (2.0 - x * r)
    return r


def _erf_f32(x, refine):
    # Abramowitz & Stegun 7.1.26 rational approximation, |err| <= 1.5e-7.
    # exp() and the reciprocal issue on the EUP slot; the polynomial is VPU.
    p = 0.3275911
    a1, a2, a3, a4, a5 = (0.254829592, -0.284496736, 1.421413741,
                          -1.453152027, 1.061405429)
    sgn = jnp.where(x >= 0.0, 1.0, -1.0)
    ax = jnp.abs(x)
    t = _recip_f32(1.0 + p * ax, refine)
    poly = ((((a5 * t + a4) * t + a3) * t + a2) * t + a1) * t
    return sgn * (1.0 - poly * jnp.exp(-ax * ax))


def _gelu_exact(x, refine):
    # Matches torch.nn.GELU() default (erf-based) semantics.
    # TODO(synk): a bf16 / tanh-approx variant would cut VALU ops ~2-3x on
    # v6e/v7x but changes numerics vs the exact-erf reference; kept in f32.
    return 0.5 * x * (1.0 + _erf_f32(x * _SQRT_HALF, refine))


# --------------------------------- kernels ------------------------------------

def _epilogue_fused_kernel(yc_ref, w_ref, b_ref, o_ref, *, H, mxu_dtype, refine):
    # yc_ref: (H, tL) causal SSM conv output (D-skip already folded into the
    #         conv kernel in the wrapper, so no `u` stream / no `+ u*D` here).
    # w_ref:  (2H, H) fused 1x1 Conv1d weight; b_ref: (2H, 1) bias.
    # o_ref:  (H, tL) output block.
    y = _gelu_exact(yc_ref[...], refine).astype(mxu_dtype)
    z = jnp.dot(w_ref[...], y, preferred_element_type=jnp.float32) + b_ref[...]
    # GLU(dim=channel): first half gated by sigmoid of second half (EUP).
    o_ref[...] = (z[:H] * jax.nn.sigmoid(z[H:])).astype(o_ref.dtype)


def _epilogue_split_kernel(yc_ref, w1_ref, w2_ref, b1_ref, b2_ref, o_ref, *,
                           mxu_dtype, refine):
    # Fallback for H % 8 != 0 (sublane slice of a fused z would not be a free
    # view): two (H,H) matmuls instead of one (2H,H).
    y = _gelu_exact(yc_ref[...], refine).astype(mxu_dtype)
    z1 = jnp.dot(w1_ref[...], y, preferred_element_type=jnp.float32) + b1_ref[...]
    z2 = jnp.dot(w2_ref[...], y, preferred_element_type=jnp.float32) + b2_ref[...]
    o_ref[...] = (z1 * jax.nn.sigmoid(z2)).astype(o_ref.dtype)


# ------------------------------ tiling helpers --------------------------------

def _tpu_vmem_bytes():
    try:
        info = pltpu.get_tpu_info()
        return int(getattr(info, "vmem_capacity_bytes", 64 << 20))
    except Exception:  # non-TPU / query failure: assume the small (v7x) budget
        return 64 << 20


def _choose_l_tile(L, H, vmem_bytes):
    # Lane-dense (multiple-of-128) tiles.  Cap one stream's block so that
    # 2 streamed f32 arrays x 2 pipeline buffers fit comfortably: ~6 MiB/block
    # on 128-MiB-VMEM parts (v5e/v6e), ~2 MiB/block on 64-MiB parts (v7x).
    cap = (6 << 20) if vmem_bytes >= (100 << 20) else (2 << 20)
    for cand in (1024, 512, 256, 128):
        if L % cand == 0 and H * cand * 4 <= cap:
            return cand
    return 128


# --------------------------------- wrapper ------------------------------------

@functools.partial(jax.jit, static_argnames=("mxu_dtype",))
def s4d_forward_pallas(u, k, D, W, bias, *, mxu_dtype=jnp.bfloat16):
    """u: (B, H, L) f32.  Returns y: (B, H, L) f32 (module returns (y, None))."""
    B, H, L = u.shape
    u = u.astype(jnp.float32)

    # Causal SSM convolution via FFT in plain XLA: O(H*L*logL), same math as
    # the PyTorch reference (rfft/irfft with n=2L).  The D skip is folded into
    # the conv kernel — conv(u, k + D*delta) == conv(u, k) + D*u — so the
    # Pallas epilogue never has to read `u` from HBM.
    # TODO(synk): no FFT primitive exists in Pallas/Mosaic; rfft/irfft stay in XLA.
    k_fold = k.astype(jnp.float32).at[:, 0].add(D.astype(jnp.float32))
    k_f = jnp.fft.rfft(k_fold, n=2 * L)
    u_f = jnp.fft.rfft(u, n=2 * L)
    y_conv = jnp.fft.irfft(u_f * k_f, n=2 * L)            # (B, H, 2L) f32

    vmem_bytes = _tpu_vmem_bytes()
    if L % 128 == 0:
        # Feed the raw (B, H, 2L) irfft buffer straight into the kernel; the
        # index_map only addresses block columns [0, L/tL), so the materializing
        # [..., :L] slice (an extra full read+write of HBM) is not needed.
        tL = _choose_l_tile(L, H, vmem_bytes)
        yc_in = y_conv
    else:
        # Small / non-128-multiple L: single full-width block (always legal).
        # TODO(synk): large non-128-multiple L should pad L to a multiple of 128
        # (or use a masked tail tile) to keep stores lane-dense.
        tL = L
        yc_in = y_conv[..., :L]

    # bB = 1 (batch dim squeezed out of the kernel); grid has >= B steps so both
    # v7x TensorCores get work under ("parallel", "parallel").
    grid = (B, L // tL)

    data_spec = pl.BlockSpec((None, H, tL), lambda b, l: (b, 0, l))
    const_spec = lambda shape: pl.BlockSpec(shape, lambda b, l: (0, 0))  # resident

    refine = (mxu_dtype == jnp.float32)   # Newton step only on the exact path
    if H % 8 == 0:
        kernel = functools.partial(_epilogue_fused_kernel, H=H,
                                   mxu_dtype=mxu_dtype, refine=refine)
        w_args = (W.astype(mxu_dtype),                           # (2H, H)
                  bias.reshape(2 * H, 1).astype(jnp.float32))    # (2H, 1)
        w_specs = [const_spec((2 * H, H)), const_spec((2 * H, 1))]
    else:
        kernel = functools.partial(_epilogue_split_kernel,
                                   mxu_dtype=mxu_dtype, refine=refine)
        w_args = (W[:H].astype(mxu_dtype), W[H:].astype(mxu_dtype),
                  bias[:H].reshape(H, 1).astype(jnp.float32),
                  bias[H:].reshape(H, 1).astype(jnp.float32))
        w_specs = [const_spec((H, H)), const_spec((H, H)),
                   const_spec((H, 1)), const_spec((H, 1))]

    vmem_limit = (64 << 20) if vmem_bytes >= (100 << 20) else (40 << 20)

    return pl.pallas_call(
        kernel,
        out_shape=jax.ShapeDtypeStruct((B, H, L), jnp.float32),
        grid_spec=pltpu.PrefetchScalarGridSpec(
            num_scalar_prefetch=0,
            grid=grid,
            in_specs=[data_spec] + w_specs,
            out_specs=data_spec,
        ),
        compiler_params=pltpu.CompilerParams(
            dimension_semantics=("parallel", "parallel"),
            vmem_limit_bytes=vmem_limit),
    )(yc_in, *w_args)


# ----------------------- parameter setup / JAX glue --------------------------

def compute_ssm_kernel(Cr, Ci, log_dt, log_A_real, A_imag, L):
    """S4DKernel.forward(L): returns the real conv kernel k of shape (H, L)."""
    C = Cr + 1j * Ci                                    # (H, N/2) complex64
    A = -jnp.exp(log_A_real) + 1j * A_imag              # (H, N/2)
    dt = jnp.exp(log_dt)                                # (H,)
    dtA = A * dt[:, None]                               # (H, N/2)
    K = dtA[:, :, None] * jnp.arange(L)                 # (H, N/2, L)
    C = C * (jnp.exp(dtA) - 1.0) / A
    k = 2.0 * jnp.einsum('hn,hnl->hl', C, jnp.exp(K)).real
    return k.astype(jnp.float32)


def init_params(key, H, N):
    """Deterministic synthetic init mirroring the PyTorch __init__ shapes."""
    N2 = N // 2
    k1, k2, k3, k4 = jax.random.split(key, 4)
    D = jax.random.normal(k1, (H,), jnp.float32)                 # torch.randn(h)
    log_dt = (jax.random.uniform(k2, (H,), jnp.float32)
              * (math.log(0.1) - math.log(0.001)) + math.log(0.001))
    Cr = jnp.ones((H, N2), jnp.float32)                          # C = 1 + 0j
    Ci = jnp.zeros((H, N2), jnp.float32)
    log_A_real = jnp.log(0.5 * jnp.ones((H, N2), jnp.float32))
    A_imag = math.pi * jnp.broadcast_to(
        jnp.arange(N2, dtype=jnp.float32), (H, N2))
    # Conv1d(H, 2H, kernel_size=1) default init: U(-1/sqrt(H), 1/sqrt(H))
    bound = 1.0 / math.sqrt(H)
    W = jax.random.uniform(k3, (2 * H, H), jnp.float32, -bound, bound)
    bias = jax.random.uniform(k4, (2 * H,), jnp.float32, -bound, bound)
    return dict(D=D, log_dt=log_dt, Cr=Cr, Ci=Ci, log_A_real=log_A_real,
                A_imag=A_imag, W=W, bias=bias)


def s4d_forward_ref(u, k, D, W, bias, w_dtype=jnp.float32):
    """Pure-JAX reference matching the PyTorch forward (FFT conv + exact skip).

    w_dtype=bf16 mimics the kernel's fast-path operand rounding of the 1x1
    conv (products/accumulation still f32) for apples-to-apples checks.
    """
    B, H, L = u.shape
    k_f = jnp.fft.rfft(k, n=2 * L)
    u_f = jnp.fft.rfft(u, n=2 * L)
    y = jnp.fft.irfft(u_f * k_f, n=2 * L)[..., :L]
    y = y + u * D[None, :, None]
    y = jax.nn.gelu(y, approximate=False)
    Wc = W.astype(w_dtype).astype(jnp.float32)
    yc = y.astype(w_dtype).astype(jnp.float32)
    z = jnp.einsum('ch,bhl->bcl', Wc, yc,
                   precision=jax.lax.Precision.HIGHEST) + bias[None, :, None]
    return z[:, :H] * jax.nn.sigmoid(z[:, H:])


# ---------------------------------- main --------------------------------------

def _run_case(key, B, H, L, N):
    kp, ku = jax.random.split(key)
    params = init_params(kp, H, N)
    u = jax.random.normal(ku, (B, H, L), jnp.float32)
    k = compute_ssm_kernel(params["Cr"], params["Ci"], params["log_dt"],
                           params["log_A_real"], params["A_imag"], L)

    # Exact path (f32 MXU operands) vs. exact-erf reference — tight tolerance
    # (the only extra roundoff is routing D*u through the FFT, ~1e-6 relative).
    out_f32 = jax.block_until_ready(
        s4d_forward_pallas(u, k, params["D"], params["W"], params["bias"],
                           mxu_dtype=jnp.float32))
    ref_f32 = s4d_forward_ref(u, k, params["D"], params["W"], params["bias"])
    np.testing.assert_allclose(np.asarray(out_f32), np.asarray(ref_f32),
                               rtol=1e-4, atol=2e-4)

    # Default fast path (bf16 MXU operands, f32 accumulation, approx recip in
    # erf) vs. a reference with the same operand rounding.
    out_bf16 = jax.block_until_ready(
        s4d_forward_pallas(u, k, params["D"], params["W"], params["bias"]))
    ref_bf16 = s4d_forward_ref(u, k, params["D"], params["W"], params["bias"],
                               w_dtype=jnp.bfloat16)
    np.testing.assert_allclose(np.asarray(out_bf16), np.asarray(ref_bf16),
                               rtol=1e-2, atol=1e-2)

    assert out_f32.shape == (B, H, L)


if __name__ == "__main__":
    root = jax.random.PRNGKey(0)
    k_small, k_big = jax.random.split(root)
    # Module-scale tiny shapes: exercises the split-W fallback (H % 8 != 0) and
    # the full-L block path for non-128-multiple L.
    _run_case(k_small, B=2, H=4, L=16, N=8)
    # 128-aligned shapes: exercises the fused (2H,H) matmul, lane-dense L tiles
    # on the raw (B, H, 2L) conv buffer, and the squeezed-batch grid.
    _run_case(k_big, B=2, H=8, L=256, N=16)
    print("KERNEL_OK")
</pallas_src>

<mosaic_0001>
module attributes {stable_mosaic.version = 11 : i64} {
  func.func @_epilogue_split_kernel(%arg0: i32, %arg1: i32, %arg2: memref<1x4x16xf32, #tpu.memory_space<vmem>>, %arg3: memref<4x4xf32, #tpu.memory_space<vmem>>, %arg4: memref<4x4xf32, #tpu.memory_space<vmem>>, %arg5: memref<4x1xf32, #tpu.memory_space<vmem>>, %arg6: memref<4x1xf32, #tpu.memory_space<vmem>>, %arg7: memref<1x4x16xf32, #tpu.memory_space<vmem>>) attributes {dimension_semantics = [#tpu.dimension_semantics<parallel>, #tpu.dimension_semantics<parallel>], iteration_bounds = array<i64: 2, 1>, scalar_prefetch = 0 : i64, scratch_operands = 0 : i64, tpu.core_type = #tpu.core_type<tc>, window_params = [{transform_indices = @transform_0, window_bounds = array<i64: 1, 4, 16>}, {pipeline_mode = #tpu.pipeline_mode<synchronous>, transform_indices = @transform_1, window_bounds = array<i64: 4, 4>}, {pipeline_mode = #tpu.pipeline_mode<synchronous>, transform_indices = @transform_2, window_bounds = array<i64: 4, 4>}, {pipeline_mode = #tpu.pipeline_mode<synchronous>, transform_indices = @transform_3, window_bounds = array<i64: 4, 1>}, {pipeline_mode = #tpu.pipeline_mode<synchronous>, transform_indices = @transform_4, window_bounds = array<i64: 4, 1>}, {transform_indices = @transform_5, window_bounds = array<i64: 1, 4, 16>}]} {
    %c0 = arith.constant 0 : index
    %c0_0 = arith.constant 0 : index
    %c0_1 = arith.constant 0 : index
    %0 = vector.load %arg2[%c0, %c0_0, %c0_1] : memref<1x4x16xf32, #tpu.memory_space<vmem>>, vector<1x4x16xf32>
    %1 = vector.shape_cast %0 : vector<1x4x16xf32> to vector<4x16xf32>
    %cst = arith.constant 5.000000e-01 : f32
    %2 = vector.broadcast %cst : f32 to vector<4x16xf32>
    %3 = arith.mulf %2, %1 : vector<4x16xf32>
    %cst_2 = arith.constant 0.707106769 : f32
    %4 = vector.broadcast %cst_2 : f32 to vector<4x16xf32>
    %5 = arith.mulf %1, %4 : vector<4x16xf32>
    %cst_3 = arith.constant 0.000000e+00 : f32
    %6 = vector.broadcast %cst_3 : f32 to vector<4x16xf32>
    %7 = arith.cmpf oge, %5, %6 : vector<4x16xf32>
    %cst_4 = arith.constant 1.000000e+00 : f32
    %cst_5 = arith.constant -1.000000e+00 : f32
    %8 = vector.broadcast %cst_4 : f32 to vector<4x16xf32>
    %9 = vector.broadcast %cst_5 : f32 to vector<4x16xf32>
    %10 = arith.select %7, %8, %9 : vector<4x16xi1>, vector<4x16xf32>
    %11 = math.absf %5 : vector<4x16xf32>
    %cst_6 = arith.constant 0.327591091 : f32
    %12 = vector.broadcast %cst_6 : f32 to vector<4x16xf32>
    %13 = arith.mulf %12, %11 : vector<4x16xf32>
    %cst_7 = arith.constant 1.000000e+00 : f32
    %14 = vector.broadcast %cst_7 : f32 to vector<4x16xf32>
    %15 = arith.addf %14, %13 : vector<4x16xf32>
    %16 = tpu.reciprocal %15 {approx = true} : vector<4x16xf32> -> vector<4x16xf32>
    %17 = arith.mulf %15, %16 : vector<4x16xf32>
    %cst_8 = arith.constant 2.000000e+00 : f32
    %18 = vector.broadcast %cst_8 : f32 to vector<4x16xf32>
    %19 = arith.subf %18, %17 : vector<4x16xf32>
    %20 = arith.mulf %16, %19 : vector<4x16xf32>
    %cst_9 = arith.constant 1.06140542 : f32
    %21 = vector.broadcast %cst_9 : f32 to vector<4x16xf32>
    %22 = arith.mulf %21, %20 : vector<4x16xf32>
    %cst_10 = arith.constant -1.45315206 : f32
    %23 = vector.broadcast %cst_10 : f32 to vector<4x16xf32>
    %24 = arith.addf %22, %23 : vector<4x16xf32>
    %25 = arith.mulf %24, %20 : vector<4x16xf32>
    %cst_11 = arith.constant 1.42141378 : f32
    %26 = vector.broadcast %cst_11 : f32 to vector<4x16xf32>
    %27 = arith.addf %25, %26 : vector<4x16xf32>
    %28 = arith.mulf %27, %20 : vector<4x16xf32>
    %cst_12 = arith.constant -0.284496725 : f32
    %29 = vector.broadcast %cst_12 : f32 to vector<4x16xf32>
    %30 = arith.addf %28, %29 : vector<4x16xf32>
    %31 = arith.mulf %30, %20 : vector<4x16xf32>
    %cst_13 = arith.constant 0.254829586 : f32
    %32 = vector.broadcast %cst_13 : f32 to vector<4x16xf32>
    %33 = arith.addf %31, %32 : vector<4x16xf32>
    %34 = arith.mulf %33, %20 : vector<4x16xf32>
    %cst_14 = arith.constant 0.000000e+00 : f32
    %35 = vector.broadcast %cst_14 : f32 to vector<4x16xf32>
    %36 = arith.subf %35, %11 : vector<4x16xf32>
    %37 = arith.mulf %36, %11 : vector<4x16xf32>
    %38 = math.exp %37 : vector<4x16xf32>
    %39 = arith.mulf %34, %38 : vector<4x16xf32>
    %cst_15 = arith.constant 1.000000e+00 : f32
    %40 = vector.broadcast %cst_15 : f32 to vector<4x16xf32>
    %41 = arith.subf %40, %39 : vector<4x16xf32>
    %42 = arith.mulf %10, %41 : vector<4x16xf32>
    %cst_16 = arith.constant 1.000000e+00 : f32
    %43 = vector.broadcast %cst_16 : f32 to vector<4x16xf32>
    %44 = arith.addf %43, %42 : vector<4x16xf32>
    %45 = arith.mulf %3, %44 : vector<4x16xf32>
    %c0_17 = arith.constant 0 : index
    %c0_18 = arith.constant 0 : index
    %46 = vector.load %arg3[%c0_17, %c0_18] : memref<4x4xf32, #tpu.memory_space<vmem>>, vector<4x4xf32>
    %cst_19 = arith.constant dense<0.000000e+00> : vector<4x16xf32>
    %47 = tpu.matmul %46, %45, %cst_19 {dimension_numbers = #tpu.dot_dimension_numbers<[1], [0], [0], [1], [0, 0, 1, 1], [], []>} : vector<4x4xf32>, vector<4x16xf32>, vector<4x16xf32> -> vector<4x16xf32>
    %c0_20 = arith.constant 0 : index
    %c0_21 = arith.constant 0 : index
    %48 = vector.load %arg5[%c0_20, %c0_21] : memref<4x1xf32, #tpu.memory_space<vmem>>, vector<4x1xf32>
    %49 = vector.broadcast %48 : vector<4x1xf32> to vector<4x16xf32>
    %50 = arith.addf %47, %49 : vector<4x16xf32>
    %c0_22 = arith.constant 0 : index
    %c0_23 = arith.constant 0 : index
    %51 = vector.load %arg4[%c0_22, %c0_23] : memref<4x4xf32, #tpu.memory_space<vmem>>, vector<4x4xf32>
    %cst_24 = arith.constant dense<0.000000e+00> : vector<4x16xf32>
    %52 = tpu.matmul %51, %45, %cst_24 {dimension_numbers = #tpu.dot_dimension_numbers<[1], [0], [0], [1], [0, 0, 1, 1], [], []>} : vector<4x4xf32>, vector<4x16xf32>, vector<4x16xf32> -> vector<4x16xf32>
    %c0_25 = arith.constant 0 : index
    %c0_26 = arith.constant 0 : index
    %53 = vector.load %arg6[%c0_25, %c0_26] : memref<4x1xf32, #tpu.memory_space<vmem>>, vector<4x1xf32>
    %54 = vector.broadcast %53 : vector<4x1xf32> to vector<4x16xf32>
    %55 = arith.addf %52, %54 : vector<4x16xf32>
    %56 = arith.negf %55 : vector<4x16xf32>
    %57 = math.exp %56 : vector<4x16xf32>
    %cst_27 = arith.constant 1.000000e+00 : f32
    %58 = vector.broadcast %cst_27 : f32 to vector<4x16xf32>
    %59 = arith.addf %58, %57 : vector<4x16xf32>
    %60 = arith.divf %58, %59 : vector<4x16xf32>
    %61 = arith.mulf %50, %60 : vector<4x16xf32>
    %c0_28 = arith.constant 0 : index
    %c0_29 = arith.constant 0 : index
    %c0_30 = arith.constant 0 : index
    %62 = vector.load %arg7[%c0_28, %c0_29, %c0_30] : memref<1x4x16xf32, #tpu.memory_space<vmem>>, vector<1x4x16xf32>
    %63 = vector.shape_cast %62 : vector<1x4x16xf32> to vector<4x16xf32>
    %64 = vector.shape_cast %61 : vector<4x16xf32> to vector<1x4x16xf32>
    tpu.vector_store %arg7[%c0_28, %c0_29, %c0_30], %64 {strides = array<i32>} : memref<1x4x16xf32, #tpu.memory_space<vmem>>, vector<1x4x16xf32>,
    return
  }
  func.func @transform_0(%arg0: i32, %arg1: i32) -> (i32, i32, i32) {
    %c0_i32 = arith.constant 0 : i32
    %c0_i32_0 = arith.constant 0 : i32
    return %arg0, %c0_i32, %arg1 : i32, i32, i32
  }
  func.func @transform_1(%arg0: i32, %arg1: i32) -> (i32, i32) {
    %c0_i32 = arith.constant 0 : i32
    %c0_i32_0 = arith.constant 0 : i32
    %c0_i32_1 = arith.constant 0 : i32
    return %c0_i32, %c0_i32_0 : i32, i32
  }
  func.func @transform_2(%arg0: i32, %arg1: i32) -> (i32, i32) {
    %c0_i32 = arith.constant 0 : i32
    %c0_i32_0 = arith.constant 0 : i32
    %c0_i32_1 = arith.constant 0 : i32
    return %c0_i32, %c0_i32_0 : i32, i32
  }
  func.func @transform_3(%arg0: i32, %arg1: i32) -> (i32, i32) {
    %c0_i32 = arith.constant 0 : i32
    %c0_i32_0 = arith.constant 0 : i32
    %c0_i32_1 = arith.constant 0 : i32
    return %c0_i32, %c0_i32_0 : i32, i32
  }
  func.func @transform_4(%arg0: i32, %arg1: i32) -> (i32, i32) {
    %c0_i32 = arith.constant 0 : i32
    %c0_i32_0 = arith.constant 0 : i32
    %c0_i32_1 = arith.constant 0 : i32
    return %c0_i32, %c0_i32_0 : i32, i32
  }
  func.func @transform_5(%arg0: i32, %arg1: i32) -> (i32, i32, i32) {
    %c0_i32 = arith.constant 0 : i32
    %c0_i32_0 = arith.constant 0 : i32
    return %arg0, %c0_i32, %arg1 : i32, i32, i32
  }
}

</mosaic_0001>

<llo_original>
// kernel: reverse.0
$region0: #{reverse.0}
  %s0 = inlined_call_operand.vmem [shape: f32[2,4,15], index: 0, kind: input, shape index: {}]
  %s1 = inlined_call_operand.vmem [shape: f32[2,4,15], index: 1, kind: output, shape index: {}]
  %v2 = vlaneseq
  %v3 = vsub.s32 14, %v2
  %4 = vset.pattern.permute.xlu0 %v3
  $region1: #{reverse.0} parent=0
    #allocation0 [shape = 'u8[8192]{0}', space=vmem, size = 0x2000, scoped, tag = 'operand span for operand 0']
    #allocation1 [shape = 'u8[4096]{0}', space=vmem, size = 0x1000, scoped, tag = 'packed  for operand 0']
    #allocation2 [shape = 'u8[8192]{0}', space=vmem, size = 0x2000, scoped, tag = 'operand span for operand 1']
    #allocation3 [shape = 'u8[4096]{0}', space=vmem, size = 0x1000, scoped, tag = 'packed  for operand 1']
    // Predicated region
    $region2: #{reverse.0} parent=1 // pred_check
      _
    $region3: #{reverse.0} parent=1 // pred_check_branch
      %6 = sbr.rel (0) target = $region5
    $region4: #{reverse.0} parent=1 // pred_region
      // Predicated region
      $region6: #{reverse.0} parent=4 // pred_check
        _
      $region7: #{reverse.0} parent=4 // pred_check_branch
        %8 = sbr.rel target = $region9
      $region8: #{reverse.0} parent=4 // pred_region
        // Predicated region
        $region21: #{reverse.0} parent=8 // pred_check
          _
        $region22: #{reverse.0} parent=8 // pred_check_branch
          %26 = sbr.rel (0) target = $region24
        $region23: #{reverse.0} parent=8 // pred_region
          loop: start=0, step=1, limit=1
          $region25: #{reverse.0} parent=23 // loop_pre_header
            _
          $region26: #{reverse.0} parent=23 // loop_header
            %s28 = sphi 0, %s32
            %p29 = scmp.ge.s32.totalorder %s28, 1
            %s33 = sphi %s0, %s0
            %s34 = sphi [#allocation1], [#allocation1]
          $region27: #{reverse.0} parent=23 // loop_header_branch
            %31 = sbr.rel (%p29) target = $region31
          $region28: #{reverse.0} parent=23 // loop_body
            _
          $region29: #{reverse.0} parent=23 // loop_footer
            %s32 = sadd.s32 1, %s28
          $region30: #{reverse.0} parent=23 // loop_footer_branch
            %27 = sbr.rel target = $region26
          $region31: #{reverse.0} parent=23 // loop_exit
            _
          %s36 = ssub.s32 16, 1
          loop: start=0, step=1, limit=1
          $region32: #{reverse.0} parent=23 // loop_pre_header
            _
          $region33: #{reverse.0} parent=23 // loop_header
            %s38 = sphi 0, %s42
            %p39 = scmp.ge.s32.totalorder %s38, 1
            %s43 = sphi %s0, %s0
            %s44 = sphi [#allocation1], [#allocation1]
          $region34: #{reverse.0} parent=23 // loop_header_branch
            %41 = sbr.rel (%p39) target = $region38
          $region35: #{reverse.0} parent=23 // loop_body
            %v45 = vld [vmem:[%s43] sm:%s36]
            %46 = vst [vmem:[%s44] sm:%s36] %v45
            %v47 = vld [vmem:[%s43 + $0x4] sm:%s36]
            %48 = vst [vmem:[%s44 + $0x4] sm:%s36] %v47
          $region36: #{reverse.0} parent=23 // loop_footer
            %s42 = sadd.s32 1, %s38
          $region37: #{reverse.0} parent=23 // loop_footer_branch
            %37 = sbr.rel target = $region33
          $region38: #{reverse.0} parent=23 // loop_exit
            _
        $region24: #{reverse.0} parent=8 // pred_fallthru
          _
      $region9: #{reverse.0} parent=4 // pred_fallthru
        _
      // Predicated region
      $region10: #{reverse.0} parent=4 // pred_check
        _
      $region11: #{reverse.0} parent=4 // pred_check_branch
        %10 = sbr.rel (0) target = $region13
      $region12: #{reverse.0} parent=4 // pred_region
        %s12 = ssub.s32 16, 1
        loop: start=0, step=1, limit=1
        $region14: #{reverse.0} parent=12 // loop_pre_header
          _
        $region15: #{reverse.0} parent=12 // loop_header
          %s14 = sphi 0, %s18
          %p15 = scmp.ge.s32.totalorder %s14, 1
          %s19 = sphi %s0, %s0
          %s20 = sphi [#allocation1], [#allocation1]
        $region16: #{reverse.0} parent=12 // loop_header_branch
          %17 = sbr.rel (%p15) target = $region20
        $region17: #{reverse.0} parent=12 // loop_body
          %v21 = vld [vmem:[%s19] sm:%s12]
          %22 = vst [vmem:[%s20] sm:%s12] %v21
          %v23 = vld [vmem:[%s19 + $0x4] sm:%s12]
          %24 = vst [vmem:[%s20 + $0x4] sm:%s12] %v23
        $region18: #{reverse.0} parent=12 // loop_footer
          %s18 = sadd.s32 1, %s14
        $region19: #{reverse.0} parent=12 // loop_footer_branch
          %13 = sbr.rel target = $region15
        $region20: #{reverse.0} parent=12 // loop_exit
          _
      $region13: #{reverse.0} parent=4 // pred_fallthru
        _
    $region5: #{reverse.0} parent=1 // pred_fallthru
      _
    %49 = vnop
    %s51 = ssub.s32 16, 1
    %s52 = scalar_lea.vmem [#allocation1], 4
    %v53 = vld [vmem:[%s52] sm:%s51]
    %s54 = scalar_lea.vmem [#allocation0], 8
    %55 = vst [vmem:[%s54] sm:%s51] %v53
    %v56 = vld [vmem:[#allocation1] sm:%s51]
    %57 = vst [vmem:[#allocation0] sm:%s51] %v56
    %v58 = vld [vmem:[#allocation0] sm:$0xff]
    %59 = vperm.xlu0 %4, %v58
    %v60 = vpop.permute.xlu0 %59
    %61 = vst [vmem:[#allocation2] sm:$0xff] %v60
    %s62 = scalar_lea.vmem [#allocation2], 8
    %s63 = scalar_lea.vmem [#allocation0], 8
    %v64 = vld [vmem:[%s63] sm:$0xff]
    %65 = vperm.xlu0 %4, %v64
    %v66 = vpop.permute.xlu0 %65
    %67 = vst [vmem:[%s62] sm:$0xff] %v66
    %s69 = ssub.s32 16, 1
    %v70 = vld [vmem:[#allocation2] sm:%s69]
    %s72 = ssub.s32 16, 1
    %73 = vst [vmem:[#allocation3] sm:%s72] %v70
    %s74 = scalar_lea.vmem [#allocation2], 8
    %v75 = vld [vmem:[%s74] sm:%s69]
    %s77 = ssub.s32 16, 1
    %s78 = scalar_lea.vmem [#allocation3], 4
    %79 = vst [vmem:[%s78] sm:%s77] %v75
    // Predicated region
    $region39: #{reverse.0} parent=1 // pred_check
      _
    $region40: #{reverse.0} parent=1 // pred_check_branch
      %81 = sbr.rel (0) target = $region42
    $region41: #{reverse.0} parent=1 // pred_region
      // Predicated region
      $region43: #{reverse.0} parent=41 // pred_check
        _
      $region44: #{reverse.0} parent=41 // pred_check_branch
        %83 = sbr.rel target = $region46
      $region45: #{reverse.0} parent=41 // pred_region
        // Predicated region
        $region58: #{reverse.0} parent=45 // pred_check
          _
        $region59: #{reverse.0} parent=45 // pred_check_branch
          %101 = sbr.rel (0) target = $region61
        $region60: #{reverse.0} parent=45 // pred_region
          loop: start=0, step=1, limit=1
          $region62: #{reverse.0} parent=60 // loop_pre_header
            _
          $region63: #{reverse.0} parent=60 // loop_header
            %s103 = sphi 0, %s107
            %p104 = scmp.ge.s32.totalorder %s103, 1
            %s108 = sphi [#allocation3], [#allocation3]
            %s109 = sphi %s1, %s1
          $region64: #{reverse.0} parent=60 // loop_header_branch
            %106 = sbr.rel (%p104) target = $region68
          $region65: #{reverse.0} parent=60 // loop_body
            _
          $region66: #{reverse.0} parent=60 // loop_footer
            %s107 = sadd.s32 1, %s103
          $region67: #{reverse.0} parent=60 // loop_footer_branch
            %102 = sbr.rel target = $region63
          $region68: #{reverse.0} parent=60 // loop_exit
            _
          %s111 = ssub.s32 16, 1
          loop: start=0, step=1, limit=1
          $region69: #{reverse.0} parent=60 // loop_pre_header
            _
          $region70: #{reverse.0} parent=60 // loop_header
            %s113 = sphi 0, %s117
            %p114 = scmp.ge.s32.totalorder %s113, 1
            %s118 = sphi [#allocation3], [#allocation3]
            %s119 = sphi %s1, %s1
          $region71: #{reverse.0} parent=60 // loop_header_branch
            %116 = sbr.rel (%p114) target = $region75
          $region72: #{reverse.0} parent=60 // loop_body
            %v120 = vld [vmem:[%s118] sm:%s111]
            %121 = vst [vmem:[%s119] sm:%s111] %v120
            %v122 = vld [vmem:[%s118 + $0x4] sm:%s111]
            %123 = vst [vmem:[%s119 + $0x4] sm:%s111] %v122
          $region73: #{reverse.0} parent=60 // loop_footer
            %s117 = sadd.s32 1, %s113
          $region74: #{reverse.0} parent=60 // loop_footer_branch
            %112 = sbr.rel target = $region70
          $region75: #{reverse.0} parent=60 // loop_exit
            _
        $region61: #{reverse.0} parent=45 // pred_fallthru
          _
      $region46: #{reverse.0} parent=41 // pred_fallthru
        _
      // Predicated region
      $region47: #{reverse.0} parent=41 // pred_check
        _
      $region48: #{reverse.0} parent=41 // pred_check_branch
        %85 = sbr.rel (0) target = $region50
      $region49: #{reverse.0} parent=41 // pred_region
        %s87 = ssub.s32 16, 1
        loop: start=0, step=1, limit=1
        $region51: #{reverse.0} parent=49 // loop_pre_header
          _
        $region52: #{reverse.0} parent=49 // loop_header
          %s89 = sphi 0, %s93
          %p90 = scmp.ge.s32.totalorder %s89, 1
          %s94 = sphi [#allocation3], [#allocation3]
          %s95 = sphi %s1, %s1
        $region53: #{reverse.0} parent=49 // loop_header_branch
          %92 = sbr.rel (%p90) target = $region57
        $region54: #{reverse.0} parent=49 // loop_body
          %v96 = vld [vmem:[%s94] sm:%s87]
          %97 = vst [vmem:[%s95] sm:%s87] %v96
          %v98 = vld [vmem:[%s94 + $0x4] sm:%s87]
          %99 = vst [vmem:[%s95 + $0x4] sm:%s87] %v98
        $region55: #{reverse.0} parent=49 // loop_footer
          %s93 = sadd.s32 1, %s89
        $region56: #{reverse.0} parent=49 // loop_footer_branch
          %88 = sbr.rel target = $region52
        $region57: #{reverse.0} parent=49 // loop_exit
          _
      $region50: #{reverse.0} parent=41 // pred_fallthru
        _
    $region42: #{reverse.0} parent=1 // pred_fallthru
      _
    %124 = vnop

// kernel: s4d_forward_pallas.1
$region0: #{s4d_forward_pallas.1}
  #allocation0 [shape = 'u32[]', space=smem, size = 0x4, offset = 0x4, fixed_abs, tag = 'smem constant byte address 0x4 - core index']
  #allocation1 [shape = 'u32[72,128]{1,0:T(1,128)}', space=vmem, size = 0x9000, scoped, tag = 'internal scratch']
  %s0 = inlined_call_operand.vmem [shape: f32[2,4,16], index: 0, kind: input, shape index: {}]
  %s1 = inlined_call_operand.vmem [shape: f32[4,4], index: 1, kind: input, shape index: {}]
  %s2 = inlined_call_operand.vmem [shape: f32[4,4], index: 2, kind: input, shape index: {}]
  %s3 = inlined_call_operand.vmem [shape: f32[4,1], index: 3, kind: input, shape index: {}]
  %s4 = inlined_call_operand.vmem [shape: f32[4,1], index: 4, kind: input, shape index: {}]
  %s5 = inlined_call_operand.hbm [shape: f32[2,4,16], index: 5, kind: output, shape index: {}]
  %s6 = sld [smem:[#allocation0]]
  $region53: #{s4d_forward_pallas.1} parent=0
    _
  %s8 = ssub.s32 1, %s6
  %s9 = scalar_select 0, %s8, %s6
  $region1: #{s4d_forward_pallas.1} parent=0
    #allocation2 [shape = 'u8[4096]{0}', space=vmem, size = 0x1000, scoped, tag = 'output window, operand 0']
    #allocation3 [shape = 's32[2]{0}', space=sflag, size = 0x8, scoped, tag = 'scoped memory for s4d_forward_pallas.1']
    %10 = vsyncpa [#allocation3], 0
    %s11 = scalar_lea.sflag [#allocation3], 1
    %12 = vsyncpa %s11, 0
    loop: start=0, step=1, limit=4
    $region2: #{s4d_forward_pallas.1} parent=1 // loop_pre_header
      _
    $region3: #{s4d_forward_pallas.1} parent=1 // loop_header
      %s14 = sphi 0, %s18
      %p15 = scmp.ge.s32.totalorder %s14, 4
      %s21 = sphi 0, %s33
      %s22 = sphi 0, %s29
      %s23 = sphi 0, %s21
      %s24 = sphi 0, %s22
      %s25 = sphi 0, %s23
      %s26 = sphi 0, %s24
      %s38 = sphi 0, %s40
      %s41 = sphi 0, %s38
      %s42 = sphi 0, %s41
      %s58 = sphi 0, %s42
      %s62 = sphi 0, %s62
      %s64 = sphi 0, %s62
      %s65 = sphi 0, %s64
      %s79 = sphi 0, %s65
      %s83 = sphi 0, %s83
      %s85 = sphi 0, %s83
      %s86 = sphi 0, %s85
      %s100 = sphi 0, %s86
      %s104 = sphi 0, %s104
      %s106 = sphi 0, %s104
      %s107 = sphi 0, %s106
      %s121 = sphi 0, %s107
      %s125 = sphi 0, %s125
      %s127 = sphi 0, %s125
      %s128 = sphi 0, %s127
      %s142 = sphi 0, %s128
      %s150 = sphi 0, %s152
      %s153 = sphi 0, %s150
      %s154 = sphi 0, %s153
      %s170 = sphi 0, %s154
    $region4: #{s4d_forward_pallas.1} parent=1 // loop_header_branch
      %17 = sbr.rel (%p15) target = $region8
    $region5: #{s4d_forward_pallas.1} parent=1 // loop_body
      %s19 = ssub.s32 %s14, 1
      %s20 = ssub.s32 %s14, 2
      %s27 = sadd.s32 1, %s22
      %p28 = scmp.ge.s32.totalorder %s27, 1
      %s29 = scalar_select %p28, 0, %s27
      %s30 = sadd.s32 1, %s21
      %s31 = scalar_select %p28, %s30, %s21
      %p32 = scmp.ge.s32.totalorder %s31, 2
      %s33 = scalar_select %p32, 0, %s31
      %s34 = ssub.s32 %s21, %s33
      %s35 = ssub.s32 %s22, %s29
      %s36 = sor.u32 %s34, %s35
      %p37 = scmp.eq.s32.totalorder %s36, 0
      %s39 = sadd.s32 %s38, 1
      %s40 = scalar_select %p37, %s38, %s39
      %p43 = pneg %p37
      %p44 = scmp.eq.s32.totalorder %s14, 1
      %p45 = por %p43, %p44
      %p46 = scmp.ne.s32.totalorder %s38, %s41
      %p47 = scmp.eq.s32.totalorder %s14, 0
      %p48 = por %p46, %p47
      %p49 = scmp.ne.s32.totalorder %s38, %s41
      %p50 = scmp.eq.s32.totalorder %s19, 1
      %p51 = por %p49, %p50
      %p52 = scmp.ne.s32.totalorder %s41, %s42
      %p53 = scmp.eq.s32.totalorder %s19, 0
      %p54 = por %p52, %p53
      %p55 = scmp.ne.s32.totalorder %s41, %s42
      %p56 = scmp.eq.s32.totalorder %s20, 1
      %p57 = por %p55, %p56
      %p59 = scmp.ne.s32.totalorder %s42, %s58
      %p60 = scmp.eq.s32.totalorder %s20, 0
      %p61 = por %p59, %p60
      %s63 = sadd.s32 %s62, 1
      %p66 = scmp.eq.s32.totalorder %s14, 1
      %p67 = scmp.ne.s32.totalorder %s62, %s64
      %p68 = scmp.eq.s32.totalorder %s14, 0
      %p69 = por %p67, %p68
      %p70 = scmp.ne.s32.totalorder %s62, %s64
      %p71 = scmp.eq.s32.totalorder %s19, 1
      %p72 = por %p70, %p71
      %p73 = scmp.ne.s32.totalorder %s64, %s65
      %p74 = scmp.eq.s32.totalorder %s19, 0
      %p75 = por %p73, %p74
      %p76 = scmp.ne.s32.totalorder %s64, %s65
      %p77 = scmp.eq.s32.totalorder %s20, 1
      %p78 = por %p76, %p77
      %p80 = scmp.ne.s32.totalorder %s65, %s79
      %p81 = scmp.eq.s32.totalorder %s20, 0
      %p82 = por %p80, %p81
      %s84 = sadd.s32 %s83, 1
      %p87 = scmp.eq.s32.totalorder %s14, 1
      %p88 = scmp.ne.s32.totalorder %s83, %s85
      %p89 = scmp.eq.s32.totalorder %s14, 0
      %p90 = por %p88, %p89
      %p91 = scmp.ne.s32.totalorder %s83, %s85
      %p92 = scmp.eq.s32.totalorder %s19, 1
      %p93 = por %p91, %p92
      %p94 = scmp.ne.s32.totalorder %s85, %s86
      %p95 = scmp.eq.s32.totalorder %s19, 0
      %p96 = por %p94, %p95
      %p97 = scmp.ne.s32.totalorder %s85, %s86
      %p98 = scmp.eq.s32.totalorder %s20, 1
      %p99 = por %p97, %p98
      %p101 = scmp.ne.s32.totalorder %s86, %s100
      %p102 = scmp.eq.s32.totalorder %s20, 0
      %p103 = por %p101, %p102
      %s105 = sadd.s32 %s104, 1
      %p108 = scmp.eq.s32.totalorder %s14, 1
      %p109 = scmp.ne.s32.totalorder %s104, %s106
      %p110 = scmp.eq.s32.totalorder %s14, 0
      %p111 = por %p109, %p110
      %p112 = scmp.ne.s32.totalorder %s104, %s106
      %p113 = scmp.eq.s32.totalorder %s19, 1
      %p114 = por %p112, %p113
      %p115 = scmp.ne.s32.totalorder %s106, %s107
      %p116 = scmp.eq.s32.totalorder %s19, 0
      %p117 = por %p115, %p116
      %p118 = scmp.ne.s32.totalorder %s106, %s107
      %p119 = scmp.eq.s32.totalorder %s20, 1
      %p120 = por %p118, %p119
      %p122 = scmp.ne.s32.totalorder %s107, %s121
      %p123 = scmp.eq.s32.totalorder %s20, 0
      %p124 = por %p122, %p123
      %s126 = sadd.s32 %s125, 1
      %p129 = scmp.eq.s32.totalorder %s14, 1
      %p130 = scmp.ne.s32.totalorder %s125, %s127
      %p131 = scmp.eq.s32.totalorder %s14, 0
      %p132 = por %p130, %p131
      %p133 = scmp.ne.s32.totalorder %s125, %s127
      %p134 = scmp.eq.s32.totalorder %s19, 1
      %p135 = por %p133, %p134
      %p136 = scmp.ne.s32.totalorder %s127, %s128
      %p137 = scmp.eq.s32.totalorder %s19, 0
      %p138 = por %p136, %p137
      %p139 = scmp.ne.s32.totalorder %s127, %s128
      %p140 = scmp.eq.s32.totalorder %s20, 1
      %p141 = por %p139, %p140
      %p143 = scmp.ne.s32.totalorder %s128, %s142
      %p144 = scmp.eq.s32.totalorder %s20, 0
      %p145 = por %p143, %p144
      %s146 = ssub.s32 %s21, %s33
      %s147 = ssub.s32 %s22, %s29
      %s148 = sor.u32 %s146, %s147
      %p149 = scmp.eq.s32.totalorder %s148, 0
      %s151 = sadd.s32 %s150, 1
      %s152 = scalar_select %p149, %s150, %s151
      %p155 = pneg %p149
      %p156 = scmp.eq.s32.totalorder %s14, 1
      %p157 = por %p155, %p156
      %p158 = scmp.ne.s32.totalorder %s150, %s153
      %p159 = scmp.eq.s32.totalorder %s14, 0
      %p160 = por %p158, %p159
      %p161 = scmp.ne.s32.totalorder %s150, %s153
      %p162 = scmp.eq.s32.totalorder %s19, 1
      %p163 = por %p161, %p162
      %p164 = scmp.ne.s32.totalorder %s153, %s154
      %p165 = scmp.eq.s32.totalorder %s19, 0
      %p166 = por %p164, %p165
      %p167 = scmp.ne.s32.totalorder %s153, %s154
      %p168 = scmp.eq.s32.totalorder %s20, 1
      %p169 = por %p167, %p168
      %p171 = scmp.ne.s32.totalorder %s154, %s170
      %p172 = scmp.eq.s32.totalorder %s20, 0
      %p173 = por %p171, %p172
      %p174 = scmp.le.s32.totalorder 1, %s14
      %p175 = scmp.lt.s32.totalorder %s14, 3
      %p176 = pnand %p174, %p175
      %p177 = pneg %p176
      // Predicated region
      $region9: #{s4d_forward_pallas.1} parent=5 // pred_check
        _
      $region10: #{s4d_forward_pallas.1} parent=5 // pred_check_branch
        %179 = sbr.rel (%p176) target = $region12
      $region11: #{s4d_forward_pallas.1} parent=5 // pred_region
        %s180 = ssub.s32 %s14, 1
        // Predicated region
        $region13: #{s4d_forward_pallas.1} parent=11 // pred_check
          %p181 = pneg %p75
        $region14: #{s4d_forward_pallas.1} parent=11 // pred_check_branch
          %183 = sbr.rel (%p181) target = $region16
        $region15: #{s4d_forward_pallas.1} parent=11 // pred_region
          _
        $region16: #{s4d_forward_pallas.1} parent=11 // pred_fallthru
          _
        // Predicated region
        $region17: #{s4d_forward_pallas.1} parent=11 // pred_check
          %p184 = pneg %p96
        $region18: #{s4d_forward_pallas.1} parent=11 // pred_check_branch
          %186 = sbr.rel (%p184) target = $region20
        $region19: #{s4d_forward_pallas.1} parent=11 // pred_region
          _
        $region20: #{s4d_forward_pallas.1} parent=11 // pred_fallthru
          _
        // Predicated region
        $region21: #{s4d_forward_pallas.1} parent=11 // pred_check
          %p187 = pneg %p117
        $region22: #{s4d_forward_pallas.1} parent=11 // pred_check_branch
          %189 = sbr.rel (%p187) target = $region24
        $region23: #{s4d_forward_pallas.1} parent=11 // pred_region
          _
        $region24: #{s4d_forward_pallas.1} parent=11 // pred_fallthru
          _
        // Predicated region
        $region25: #{s4d_forward_pallas.1} parent=11 // pred_check
          %p190 = pneg %p138
        $region26: #{s4d_forward_pallas.1} parent=11 // pred_check_branch
          %192 = sbr.rel (%p190) target = $region28
        $region27: #{s4d_forward_pallas.1} parent=11 // pred_region
          _
        $region28: #{s4d_forward_pallas.1} parent=11 // pred_fallthru
          _
      $region12: #{s4d_forward_pallas.1} parent=5 // pred_fallthru
        _
      %p193 = scmp.lt.s32.totalorder %s14, 2
      // Predicated region
      $region29: #{s4d_forward_pallas.1} parent=5 // pred_check
        %p194 = pneg %p193
      $region30: #{s4d_forward_pallas.1} parent=5 // pred_check_branch
        %196 = sbr.rel (%p194) target = $region32
      $region31: #{s4d_forward_pallas.1} parent=5 // pred_region
        // Predicated region
        $region33: #{s4d_forward_pallas.1} parent=31 // pred_check
          %p197 = pneg %p48
        $region34: #{s4d_forward_pallas.1} parent=31 // pred_check_branch
          %199 = sbr.rel (%p197) target = $region36
        $region35: #{s4d_forward_pallas.1} parent=31 // pred_region
          %p200 = scmp.lt.s32.totalorder %s21, 1
          %s201 = scalar_select %p200, %s21, 1
          %p202 = scmp.lt.s32.totalorder %s22, 0
          %s203 = scalar_select %p202, %s22, 0
          %s204 = sadd.s32 %s203, %s201
          %s205 = smul.addr %s204, 4
          %s206 = scalar_lea.vmem %s0, %s205
        $region36: #{s4d_forward_pallas.1} parent=31 // pred_fallthru
          _
      $region32: #{s4d_forward_pallas.1} parent=5 // pred_fallthru
        _
      %p207 = scmp.le.s32.totalorder 1, %s14
      %p208 = scmp.lt.s32.totalorder %s14, 3
      %p209 = pnand %p207, %p208
      %p210 = pneg %p209
      // Predicated region
      $region37: #{s4d_forward_pallas.1} parent=5 // pred_check
        _
      $region38: #{s4d_forward_pallas.1} parent=5 // pred_check_branch
        %212 = sbr.rel (%p209) target = $region40
      $region39: #{s4d_forward_pallas.1} parent=5 // pred_region
        %s213 = ssub.s32 %s14, 1
        %p214 = scmp.lt.s32.totalorder %s23, 1
        %s215 = scalar_select %p214, %s23, 1
        %p216 = scmp.lt.s32.totalorder %s24, 0
        %s217 = scalar_select %p216, %s24, 0
        %s218 = sadd.s32 %s217, %s215
        %s219 = smul.addr %s218, 4
        %s220 = scalar_lea.vmem %s0, %s219
        %p221 = pneg %p54
        %p222 = pneg %p51
        %p223 = pneg %p75
        %p224 = pneg %p72
        %p225 = pneg %p96
        %p226 = pneg %p93
        %p227 = pneg %p117
        %p228 = pneg %p114
        %p229 = pneg %p138
        %p230 = pneg %p135
        %p231 = pneg %p166
        %p232 = pneg %p163
        %s233 = sand.u32 %s153, 1
        %s234 = scalar_lea.sflag [#allocation3], %s233
        %s235 = sand.u32 %s153, 1
        %s236 = smul.addr %s235, 4
        %s237 = scalar_lea.vmem [#allocation2], %s236
        %p238 = scmp.lt.s32.totalorder %s23, 1
        %s239 = scalar_select %p238, %s23, 1
        %p240 = scmp.lt.s32.totalorder %s24, 0
        %s241 = scalar_select %p240, %s24, 0
        %s242 = sadd.s32 %s241, %s239
        %s243 = smul.addr %s242, 4
        %s244 = scalar_lea.vmem %s0, %s243
        %v245 = vld [vmem:[%s244] sm:$0xf]
        %v246 = vmul.f32 %v245, 0.5
        %v247 = vmul.f32 %v245, 0.70710677
        %vm248 = vcmp.ge.f32.partialorder %v247, 0.0
        %v249 = vsel %vm248, 1.0, -1.0
        %v250 = vand.u32 2147483647, %v247
        %v251 = vmul.f32 %v250, 0.3275911
        %v252 = vadd.f32 %v251, 1.0
        %v253 = vrcp.pop %v252
        %v254 = vmul.f32 %v252, %v253
        %v255 = vsub.f32 2.0, %v254
        %v256 = vmul.f32 %v253, %v255
        %v257 = vmul.f32 %v256, 1.0614054
        %v258 = vadd.f32 %v257, -1.4531521
        %v259 = vmul.f32 %v258, %v256
        %v260 = vadd.f32 %v259, 1.4214138
        %v261 = vmul.f32 %v260, %v256
        %v262 = vadd.f32 %v261, -0.28449672
        %v263 = vmul.f32 %v262, %v256
        %v264 = vadd.f32 %v263, 0.2548296
        %v265 = vmul.f32 %v264, %v256
        %v266 = vsub.f32 0.0, %v250
        %v267 = vmul.f32 %v266, %v250
        %v268 = vmul.f32 %v267, 1.442695
        %v269 = vpow.pop %v268
        %v270 = vmul.f32 %v265, %v269
        %v271 = vsub.f32 1.0, %v270
        %v272 = vmul.f32 %v249, %v271
        %v273 = vadd.f32 %v272, 1.0
        %v274 = vmul.f32 %v246, %v273
        %v275 = vld [vmem:[%s1] sm:$0xf]
        %v276 = vld [vmem:[%s3] sm:$0xf]
        %278 = vset.pattern.permute.xlu0 0
        %279 = vperm.xlu0 %278, %v276
        %v280 = vpop.permute.xlu0 %279
        %vm282 = vcmask 31744
        %v284 = vsel %vm282, %v275, 0
        %vm286 = vcmask 1043456
        %v288 = vsel %vm286, %v274, 0
        %290 = vmatpush.msra.mxu0 0.0
        %291 = vmatpush.msra.mxu0 0.0
        %292 = vmatpush.msra.mxu0 0.0
        %293 = vmatpush.msra.mxu0 0.0
        %294 = vmatpush.msra.mxu0 0.0
        %295 = vmatpush.msra.mxu0 0.0
        %296 = vmatpush.msra.mxu0 0.0
        %297 = vmatpush.msra.mxu0 0.0
        %298 = vmatpush.msra.mxu0 0.0
        %299 = vmatpush.msra.mxu0 0.0
        %300 = vmatpush.msra.mxu0 0.0
        %301 = vmatpush.msra.mxu0 0.0
        %302 = vmatpush.msra.mxu0 0.0
        %303 = vmatpush.msra.mxu0 0.0
        %304 = vmatpush.msra.mxu0 0.0
        %305 = vmatpush.msra.mxu0 %v288
        %306 = vmatmul.f32.gmra.mxu0 %v284
        %v307 = vpop.f32.mrf.mxu0
        %v308 = vadd.f32 %v280, %v307
        %309 = vdwg.mxu0
        %v310 = vld [vmem:[%s2] sm:$0xf]
        %v311 = vld [vmem:[%s4] sm:$0xf]
        %313 = vset.pattern.permute.xlu0 0
        %314 = vperm.xlu0 %313, %v311
        %v315 = vpop.permute.xlu0 %314
        %v318 = vsel %vm282, %v310, 0
        %320 = vmatpush.msra.mxu0 0.0
        %321 = vmatpush.msra.mxu0 0.0
        %322 = vmatpush.msra.mxu0 0.0
        %323 = vmatpush.msra.mxu0 0.0
        %324 = vmatpush.msra.mxu0 0.0
        %325 = vmatpush.msra.mxu0 0.0
        %326 = vmatpush.msra.mxu0 0.0
        %327 = vmatpush.msra.mxu0 0.0
        %328 = vmatpush.msra.mxu0 0.0
        %329 = vmatpush.msra.mxu0 0.0
        %330 = vmatpush.msra.mxu0 0.0
        %331 = vmatpush.msra.mxu0 0.0
        %332 = vmatpush.msra.mxu0 0.0
        %333 = vmatpush.msra.mxu0 0.0
        %334 = vmatpush.msra.mxu0 0.0
        %335 = vmatpush.msra.mxu0 %v288
        %336 = vmatmul.f32.gmra.mxu0 %v318
        %v337 = vpop.f32.mrf.mxu0
        %v338 = vadd.f32 %v315, %v337
        %339 = vdwg.mxu0
        %v340 = vxor.u32 %v338, 2147483648
        %v341 = vmul.f32 %v340, 1.442695
        %v342 = vpow.pop %v341
        %v343 = vadd.f32 %v342, 1.0
        %v344 = vrcp.pop %v343
        %v345 = vmul.f32 %v343, %v344
        %v346 = vsub.f32 1.0, %v345
        %v347 = vmul.f32 %v344, %v346
        %v348 = vadd.f32 %v344, %v347
        %vm349 = vweird.f32 %v343
        %vm350 = vweird.f32 %v344
        %vm351 = vmor %vm349, %vm350
        %v352 = vsel %vm351, %v344, %v348
        %v353 = vand.u32 2147483647, %v343
        %vm354 = vcmp.eq.f32.partialorder %v353, 8.507059e+37
        %v355 = vand.u32 %v343, 2147483648
        %v356 = vor.u32 1.1754944e-38, %v355
        %v357 = vsel %vm354, %v356, %v352
        %v358 = vmul.f32 1.0, %v357
        %v359 = vmul.f32 %v308, %v358
        %vm360 = vcmask 125952
        %361 = vst.msk [vmem:[%s237] sm:$0xf] %vm360, %v359
        %s362 = sand.u32 %s153, 1
        %s363 = scalar_lea.sflag [#allocation3], %s362
        %s364 = sand.u32 %s153, 1
        %s365 = smul.addr %s364, 4
        %s366 = scalar_lea.vmem [#allocation2], %s365
        // Predicated region
        $region41: #{s4d_forward_pallas.1} parent=39 // pred_check
          %p367 = pneg %p163
        $region42: #{s4d_forward_pallas.1} parent=39 // pred_check_branch
          %369 = sbr.rel (%p367) target = $region44
        $region43: #{s4d_forward_pallas.1} parent=39 // pred_region
          %371 = vsyncadd %s363, 0
          %s372 = sadd.s32 %s24, %s23
          %s373 = smul.addr %s372, 4
          %s374 = scalar_lea.hbm %s5, %s373
          %s376 = sshll.u32 %s366, 4
          %s377 = int_to_ptr.vmem [resolvable:$true] %s376
          %s378 = sshll.u32 %s374, 4
          %s379 = int_to_ptr.hbm [resolvable:$true] %s378
          %381 = dma.vmem_to_hbm [thread:$0]  %s377, 64, %s379, %s363
        $region44: #{s4d_forward_pallas.1} parent=39 // pred_fallthru
          _
      $region40: #{s4d_forward_pallas.1} parent=5 // pred_fallthru
        _
      %p382 = scmp.le.s32.totalorder 2, %s14
      // Predicated region
      $region45: #{s4d_forward_pallas.1} parent=5 // pred_check
        %p383 = pneg %p382
      $region46: #{s4d_forward_pallas.1} parent=5 // pred_check_branch
        %385 = sbr.rel (%p383) target = $region48
      $region47: #{s4d_forward_pallas.1} parent=5 // pred_region
        %s386 = ssub.s32 %s14, 2
        // Predicated region
        $region49: #{s4d_forward_pallas.1} parent=47 // pred_check
          %p387 = pneg %p169
        $region50: #{s4d_forward_pallas.1} parent=47 // pred_check_branch
          %389 = sbr.rel (%p387) target = $region52
        $region51: #{s4d_forward_pallas.1} parent=47 // pred_region
          %s390 = sand.u32 %s154, 1
          %s391 = scalar_lea.sflag [#allocation3], %s390
          %s392 = sand.u32 %s154, 1
          %s393 = smul.addr %s392, 4
          %s394 = scalar_lea.vmem [#allocation2], %s393
          %396 = dma.done %s391, 64
        $region52: #{s4d_forward_pallas.1} parent=47 // pred_fallthru
          _
      $region48: #{s4d_forward_pallas.1} parent=5 // pred_fallthru
        _
    $region6: #{s4d_forward_pallas.1} parent=1 // loop_footer
      %s18 = sadd.s32 1, %s14
    $region7: #{s4d_forward_pallas.1} parent=1 // loop_footer_branch
      %13 = sbr.rel target = $region3
    $region8: #{s4d_forward_pallas.1} parent=1 // loop_exit
      _
    %397 = vsyncpa [#allocation3], 1
    %s398 = scalar_lea.sflag [#allocation3], 1
    %399 = vsyncpa %s398, 1

</llo_original>
